<compile_context>
chip_gen: v6e
topology: v6e:2x2x1
jax: 0.10.0
libtpu: 0.0.40
codegen_flags: <defaults>
</compile_context>

<pallas_src>
import jax
import jax.numpy as jnp
from jax.experimental import pallas as pl
from jax.experimental.pallas import tpu as pltpu


def _dma_copy_kernel(x_hbm_ref, o_hbm_ref, sem):
    # Single whole-array HBM -> HBM DMA: issue and block until complete.
    cp = pltpu.make_async_copy(x_hbm_ref, o_hbm_ref, sem)
    cp.start()
    cp.wait()


def _pallas_hbm_copy(x):
    """Identity copy of `x` through one HBM->HBM DMA (no VMEM staging)."""
    itemsize = jnp.dtype(x.dtype).itemsize
    return pl.pallas_call(
        _dma_copy_kernel,
        out_shape=jax.ShapeDtypeStruct(x.shape, x.dtype),
        in_specs=[pl.BlockSpec(memory_space=pl.ANY)],
        out_specs=pl.BlockSpec(memory_space=pl.ANY),
        scratch_shapes=[pltpu.SemaphoreType.DMA(())],
        cost_estimate=pl.CostEstimate(
            flops=0,
            transcendentals=0,
            bytes_accessed=2 * x.size * itemsize,
        ),
    )(x)


class Reshape:
    """JAX/Pallas equivalent of the PyTorch Reshape(nn.Module)."""

    def __init__(self, *args):
        self.shape = args

    def _resolve_shape(self, total: int):
        shape = list(self.shape)
        if shape.count(-1) > 1:
            raise ValueError("only one dimension may be -1")
        if -1 in shape:
            known = 1
            for s in shape:
                if s != -1:
                    known *= s
            if known == 0 or total % known != 0:
                raise ValueError(
                    f"cannot view {total} elements as shape {tuple(self.shape)}"
                )
            shape[shape.index(-1)] = total // known
        else:
            prod = 1
            for s in shape:
                prod *= s
            if prod != total:
                raise ValueError(
                    f"cannot view {total} elements as shape {tuple(self.shape)}"
                )
        return tuple(shape)

    def __call__(self, x):
        shape = self._resolve_shape(x.size)
        # Copy the buffer in its original shape with one HBM->HBM DMA, then
        # apply the target shape as a metadata-only reshape (row-major order,
        # identical to torch .view() on a contiguous tensor).
        out = _pallas_hbm_copy(x)
        return jnp.reshape(out, shape)


if __name__ == "__main__":
    key = jax.random.PRNGKey(0)

    # Small NCHW-style input: batch=2, channels=4, spatial=16x16 -> 2048 elems.
    x = jax.random.normal(key, (2, 4, 16, 16), dtype=jnp.float32)

    # Reshape module configured like Reshape(2, -1): flatten per-sample.
    module = Reshape(2, -1)
    fwd = jax.jit(lambda a: module(a))
    y = jax.block_until_ready(fwd(x))

    ref = jnp.reshape(x, (2, -1))
    assert y.shape == (2, 1024), y.shape
    assert y.dtype == x.dtype
    assert bool(jnp.all(y == ref))

    # Exercise a non-lane-aligned element count (105 elements) to confirm the
    # DMA path has no divisibility constraints (old fallback removed).
    key2 = jax.random.PRNGKey(1)
    x2 = jax.random.normal(key2, (3, 5, 7), dtype=jnp.float32)
    module2 = Reshape(-1)
    fwd2 = jax.jit(lambda a: module2(a))
    y2 = jax.block_until_ready(fwd2(x2))
    ref2 = jnp.reshape(x2, (-1,))
    assert y2.shape == (105,), y2.shape
    assert bool(jnp.all(y2 == ref2))

    print("KERNEL_OK")
</pallas_src>

<mosaic_0001>
module attributes {stable_mosaic.version = 11 : i64} {
  func.func @_dma_copy_kernel(%arg0: memref<2x4x16x16xf32, #tpu.memory_space<any>>, %arg1: memref<2x4x16x16xf32, #tpu.memory_space<any>>, %arg2: memref<!tpu.dma_semaphore, #tpu.memory_space<semaphore_mem>>) attributes {dimension_semantics = [], scalar_prefetch = 0 : i64, scratch_operands = 1 : i64, tpu.core_type = #tpu.core_type<tc>} {
    tpu.enqueue_dma source(%arg0 : memref<2x4x16x16xf32, #tpu.memory_space<any>>) target(%arg1 : memref<2x4x16x16xf32, #tpu.memory_space<any>>) target_semaphore(%arg2 : memref<!tpu.dma_semaphore, #tpu.memory_space<semaphore_mem>>)
    tpu.wait_dma2 semaphore(%arg2 : memref<!tpu.dma_semaphore, #tpu.memory_space<semaphore_mem>>) src(%arg0 : memref<2x4x16x16xf32, #tpu.memory_space<any>>) dst(%arg1 : memref<2x4x16x16xf32, #tpu.memory_space<any>>)
    return
  }
}

</mosaic_0001>

<llo_original>
// kernel: _lambda_.1
$region0: #{_lambda_.1}
  #allocation0 [shape = 'u32[]', space=smem, size = 0x4, offset = 0x4, fixed_abs, tag = 'smem constant byte address 0x4 - core index']
  #allocation1 [shape = 'u32[144,128]{1,0:T(1,128)}', space=vmem, size = 0x12000, scoped, tag = 'internal scratch']
  #allocation2 [shape = 's32[1]{0}', space=sflag, size = 0x4, scoped, tag = 'scratch operand']
  #allocation3 [shape = 's32[]', space=sflag, size = 0x4, offset = 0, fixed_abs, tag = 'sflag constant byte address 0x0 - dummy sync flag']
  #allocation4 [shape = 's32[]', space=sflag, size = 0x4, offset = 0, fixed_abs, tag = 'sflag constant byte address 0x0 - dummy sync flag']
  #allocation5 [shape = 'u32[]', space=smem, size = 0x4, offset = 0x44, fixed_abs, tag = 'smem constant byte address 0x44 - assertion arg 0']
  #allocation6 [shape = 'u32[]', space=smem, size = 0x4, offset = 0x48, fixed_abs, tag = 'smem constant byte address 0x48 - assertion arg 1']
  %s0 = inlined_call_operand.hbm [shape: f32[2,4,16,16], index: 0, kind: input, shape index: {}]
  %s1 = inlined_call_operand.vmem [shape: f32[2,4,16,16], index: 1, kind: output, shape index: {}]
  %s2 = sld [smem:[#allocation0]]
  $region6: #{_lambda_.1} parent=0
    _
  %s4 = ssub.s32 1, %s2
  %s5 = scalar_select 0, %s4, %s2
  // Predicated region
  $region2: #{_lambda_.1} parent=0 // pred_check
    _
  $region3: #{_lambda_.1} parent=0 // pred_check_branch
    %7 = sbr.rel target = $region5
  $region4: #{_lambda_.1} parent=0 // pred_region
    %8 = sst [smem:[#allocation5]] [#allocation4]
    %9 = sst [smem:[#allocation6]] [#allocation3]
  $region5: #{_lambda_.1} parent=0 // pred_fallthru
    _
  %11 = shalt.err (0)
  %s13 = sshll.u32 %s1, 4
  %s14 = int_to_ptr.vmem [resolvable:$true] %s13
  %16 = dma.hbm_to_vmem [thread:$0]  %s0, 2048, %s14, [#allocation2]
  %s17 = smul.u32 2, 4
  %s18 = smul.u32 %s17, 16
  %s19 = smul.u32 %s18, 1
  %s20 = sshll.u32 %s19, 4
  %21 = dma.done [#allocation2], %s20
  %22 = vsyncmov [#allocation2]
  %s23 = vpop.sfrf %22
  %p24 = scmp.eq.s32.totalorder %s23, 0
  %p25 = pneg %p24
  %27 = shalt.err (%p25)

</llo_original>
